<compile_context>
chip_gen: v5e
topology: v5e:2x2
jax: 0.10.0
libtpu: 0.0.40
codegen_flags: <defaults>
</compile_context>

<pallas_src>
import functools
import math

import numpy as np
import jax
import jax.numpy as jnp
from jax.experimental import pallas as pl
from jax.experimental.pallas import tpu as pltpu


# ------------------------------------------------------------------ utilities
def _round_up(x, m):
    return ((x + m - 1) // m) * m


def _cal_freq_list(freq_init, frequency_num, max_radius, min_radius):
    assert freq_init == "geometric"
    log_timescale_increment = math.log(float(max_radius) / float(min_radius)) / (
        frequency_num * 1.0 - 1
    )
    timescales = min_radius * np.exp(
        np.arange(frequency_num).astype(np.float64) * log_timescale_increment
    )
    return (1.0 / timescales).astype(np.float32)


# --------------------------------------------------------------------- kernel
def theory_kernel(packed_ref, sel_ref, out_ref):
    # packed_ref : (tm, 2r+1) f32  -- r coord pairs per row [x0,y0,...], last col = 1.0
    # sel_ref    : (2r+1, W)  f32  -- freq-scaled unit vectors; last row = phase (0 / pi/2)
    # out_ref    : (tm, W)    f32  -- lane-dense output (W multiple of 128)
    #
    # angle = coords . (unit_vec * freq) + phase   (phase folded into the matmul)
    angle = jnp.dot(
        packed_ref[...],
        sel_ref[...],
        preferred_element_type=jnp.float32,
        precision=jax.lax.Precision.HIGHEST,
    )
    # cos(x) = sin(x + pi/2): one transcendental per element (EUP/VALU), no select.
    out_ref[...] = jnp.sin(angle).astype(out_ref.dtype)


# ------------------------------------------------------------------ host tables
@functools.lru_cache(maxsize=None)
def _build_sel(frequency_num, max_radius, min_radius, freq_init, r):
    """Selection matrix (2r+1, W): unit vectors pre-scaled by frequency, plus a
    final row carrying the phase offset (0 for sin columns, pi/2 for cos columns)."""
    F = frequency_num
    E = 6 * F
    W = r * E
    K = 2 * r + 1
    freq_list = _cal_freq_list(freq_init, F, max_radius, min_radius)
    unit_vecs = np.stack(
        [
            np.asarray([1.0, 0.0]),
            np.asarray([-1.0 / 2.0, math.sqrt(3) / 2.0]),
            np.asarray([-1.0 / 2.0, -math.sqrt(3) / 2.0]),
        ],
        axis=1,
    )  # (2, 3) float64

    sel = np.zeros((K, W), dtype=np.float32)
    half_pi = np.float32(np.pi / 2.0)
    for j in range(r):                      # which folded coordinate row
        for f in range(F):
            for v in range(3):
                for s in range(2):          # 0 = sin, 1 = cos
                    col = j * E + f * 6 + 2 * v + s
                    sel[2 * j : 2 * j + 2, col] = (
                        unit_vecs[:, v] * float(freq_list[f])
                    ).astype(np.float32)
                    if s == 1:
                        sel[2 * r, col] = half_pi
    return sel


def _pick_tm(G8, cap=512, floor=64):
    # Tiny problems: a single block.  Otherwise aim for ~8 grid steps (balances
    # v7x's two TensorCores; on single-TC v5e/v6e the extra steps cost ~0.35us
    # each, negligible) with tiles between `floor` and `cap` rows.  VMEM footprint
    # at cap=512 is ~3 MiB (out tile 2x768 KiB + angle temp + inputs) — far under
    # every generation's limit, so tiling is driven by step count, not memory.
    if G8 <= floor:
        return G8
    tm = _round_up(-(-G8 // 8), 8)
    return max(floor, min(cap, tm))


# -------------------------------------------------------------------- wrapper
@functools.partial(
    jax.jit,
    static_argnames=("frequency_num", "max_radius", "min_radius", "freq_init", "tm"),
)
def theory_forward(
    coords,
    frequency_num=16,
    max_radius=10000,
    min_radius=1000,
    freq_init="geometric",
    tm=None,
):
    coords = jnp.asarray(coords, dtype=jnp.float32)
    N, P, coord_dim = coords.shape
    assert coord_dim == 2
    F = frequency_num
    E = 6 * F
    # fold r coordinate rows per output row so the output width is a multiple of 128 lanes
    r = 128 // math.gcd(E, 128)
    W = r * E
    K = 2 * r + 1

    sel = jnp.asarray(_build_sel(F, max_radius, min_radius, freq_init, r))

    M = N * P
    G = -(-M // r)                   # packed rows needed
    G8 = _round_up(max(G, 1), 8)     # pad only to a multiple of 8 packed rows
    pad_rows = G8 * r - M            # <= 8*r - 1 coordinate rows of padding

    if tm is None:
        tm = _pick_tm(G8)
    grid = pl.cdiv(G8, tm)           # partial last block handled by Pallas

    coords_flat = coords.reshape(M, 2)
    if pad_rows:
        coords_flat = jnp.pad(coords_flat, ((0, pad_rows), (0, 0)))
    packed = coords_flat.reshape(G8, 2 * r)          # row g = [x,y] of coords g*r .. g*r+r-1
    packed = jnp.concatenate(                        # constant-1 column carries the phase row
        [packed, jnp.ones((G8, 1), jnp.float32)], axis=1
    )

    out = pl.pallas_call(
        theory_kernel,
        out_shape=jax.ShapeDtypeStruct((G8, W), jnp.float32),
        grid_spec=pltpu.PrefetchScalarGridSpec(
            num_scalar_prefetch=0,
            grid=(grid,),
            in_specs=[
                pl.BlockSpec((tm, K), lambda i: (i, 0)),
                pl.BlockSpec((K, W), lambda i: (0, 0)),
            ],
            out_specs=pl.BlockSpec((tm, W), lambda i: (i, 0)),
        ),
        compiler_params=pltpu.CompilerParams(dimension_semantics=("parallel",)),
    )(packed, sel)

    # (G8, W) row-major is bit-identical to (G8*r, E); slice only if we padded
    # (at most 8*r-1 rows of padding thanks to the 8-row rounding above).
    flat = out.reshape(G8 * r, E)
    if pad_rows:
        flat = flat[:M]
    return flat.reshape(N, P * E)


# ------------------------------------------------------------- numpy reference
def theory_reference(coords_np, frequency_num=16, max_radius=10000, min_radius=1000):
    F = frequency_num
    freq_list = _cal_freq_list("geometric", F, max_radius, min_radius).astype(np.float64)
    freq_mat = np.repeat(np.expand_dims(freq_list, axis=1), 6, axis=1)
    unit_vec1 = np.asarray([1.0, 0.0])
    unit_vec2 = np.asarray([-1.0 / 2.0, math.sqrt(3) / 2.0])
    unit_vec3 = np.asarray([-1.0 / 2.0, -math.sqrt(3) / 2.0])
    B, P, _ = coords_np.shape
    a1 = np.expand_dims(np.matmul(coords_np, unit_vec1), axis=-1)
    a2 = np.expand_dims(np.matmul(coords_np, unit_vec2), axis=-1)
    a3 = np.expand_dims(np.matmul(coords_np, unit_vec3), axis=-1)
    angle_mat = np.concatenate([a1, a1, a2, a2, a3, a3], axis=-1)
    angle_mat = np.repeat(np.expand_dims(angle_mat, axis=-2), F, axis=-2)
    angle_mat = angle_mat * freq_mat
    spr = np.reshape(angle_mat, (B, P, -1))
    spr[:, :, 0::2] = np.sin(spr[:, :, 0::2])
    spr[:, :, 1::2] = np.cos(spr[:, :, 1::2])
    return spr.reshape(B, -1).astype(np.float32)


# ------------------------------------------------------------------------ main
if __name__ == "__main__":
    key = jax.random.PRNGKey(0)

    # case 1: M divisible by r
    N, P = 2, 8
    coords = jax.random.normal(key, (N, P, 2), dtype=jnp.float32) * 100.0
    out = jax.block_until_ready(
        theory_forward(coords, frequency_num=16, max_radius=10000, min_radius=1000)
    )
    ref = theory_reference(np.asarray(coords))
    assert out.shape == ref.shape, (out.shape, ref.shape)
    np.testing.assert_allclose(np.asarray(out), ref, rtol=1e-5, atol=1e-5)

    # case 2: M not divisible by r (exercises the padding + slice path)
    key2 = jax.random.PRNGKey(1)
    N2, P2 = 3, 5
    coords2 = jax.random.normal(key2, (N2, P2, 2), dtype=jnp.float32) * 100.0
    out2 = jax.block_until_ready(theory_forward(coords2))
    ref2 = theory_reference(np.asarray(coords2))
    assert out2.shape == ref2.shape, (out2.shape, ref2.shape)
    np.testing.assert_allclose(np.asarray(out2), ref2, rtol=1e-5, atol=1e-5)

    print("KERNEL_OK")
</pallas_src>

<mosaic_0001>
module attributes {stable_mosaic.version = 11 : i64} {
  func.func @theory_kernel(%arg0: i32, %arg1: memref<8x9xf32, #tpu.memory_space<vmem>>, %arg2: memref<9x384xf32, #tpu.memory_space<vmem>>, %arg3: memref<8x384xf32, #tpu.memory_space<vmem>>) attributes {dimension_semantics = [#tpu.dimension_semantics<parallel>], iteration_bounds = array<i64: 1>, scalar_prefetch = 0 : i64, scratch_operands = 0 : i64, tpu.core_type = #tpu.core_type<tc>, window_params = [{transform_indices = @transform_0, window_bounds = array<i64: 8, 9>}, {pipeline_mode = #tpu.pipeline_mode<synchronous>, transform_indices = @transform_1, window_bounds = array<i64: 9, 384>}, {transform_indices = @transform_2, window_bounds = array<i64: 8, 384>}]} {
    %c0 = arith.constant 0 : index
    %c0_0 = arith.constant 0 : index
    %0 = vector.load %arg1[%c0, %c0_0] : memref<8x9xf32, #tpu.memory_space<vmem>>, vector<8x9xf32>
    %c0_1 = arith.constant 0 : index
    %c0_2 = arith.constant 0 : index
    %1 = vector.load %arg2[%c0_1, %c0_2] : memref<9x384xf32, #tpu.memory_space<vmem>>, vector<9x384xf32>
    %cst = arith.constant dense<0.000000e+00> : vector<8x384xf32>
    %2 = tpu.matmul %0, %1, %cst {dimension_numbers = #tpu.dot_dimension_numbers<[1], [0], [0], [1], [0, 0, 1, 1], [], []>, precision = #tpu.contract_precision<fp32>} : vector<8x9xf32>, vector<9x384xf32>, vector<8x384xf32> -> vector<8x384xf32>
    %3 = math.sin %2 : vector<8x384xf32>
    %c0_3 = arith.constant 0 : index
    %c0_4 = arith.constant 0 : index
    %4 = vector.load %arg3[%c0_3, %c0_4] : memref<8x384xf32, #tpu.memory_space<vmem>>, vector<8x384xf32>
    tpu.vector_store %arg3[%c0_3, %c0_4], %3 {strides = array<i32>} : memref<8x384xf32, #tpu.memory_space<vmem>>, vector<8x384xf32>,
    return
  }
  func.func @transform_0(%arg0: i32) -> (i32, i32) {
    %c0_i32 = arith.constant 0 : i32
    %c0_i32_0 = arith.constant 0 : i32
    return %arg0, %c0_i32 : i32, i32
  }
  func.func @transform_1(%arg0: i32) -> (i32, i32) {
    %c0_i32 = arith.constant 0 : i32
    %c0_i32_0 = arith.constant 0 : i32
    %c0_i32_1 = arith.constant 0 : i32
    return %c0_i32, %c0_i32_0 : i32, i32
  }
  func.func @transform_2(%arg0: i32) -> (i32, i32) {
    %c0_i32 = arith.constant 0 : i32
    %c0_i32_0 = arith.constant 0 : i32
    return %arg0, %c0_i32 : i32, i32
  }
}

</mosaic_0001>

<llo_original>
// kernel: theory_forward.1
$region0: #{theory_forward.1}
  #allocation0 [shape = 'u32[]', space=smem, size = 0x4, offset = 0x4, fixed_abs, tag = 'smem constant byte address 0x4 - core index']
  #allocation1 [shape = 'u32[72,128]{1,0:T(1,128)}', space=vmem, size = 0x9000, scoped, tag = 'internal scratch']
  %s0 = inlined_call_operand.vmem [shape: f32[8,9], index: 0, kind: input, shape index: {}]
  %s1 = inlined_call_operand.vmem [shape: f32[9,384], index: 1, kind: input, shape index: {}]
  %s2 = inlined_call_operand.vmem [shape: f32[8,384], index: 2, kind: output, shape index: {}]
  %s3 = sld [smem:[#allocation0]]
  $region18: #{theory_forward.1} parent=0
    _
  %s5 = ssub.s32 1, %s3
  %s6 = scalar_select 0, %s5, %s3
  // Predicated region
  $region2: #{theory_forward.1} parent=0 // pred_check
    _
  $region3: #{theory_forward.1} parent=0 // pred_check_branch
    %8 = sbr.rel (0) target = $region5
  $region4: #{theory_forward.1} parent=0 // pred_region
    _
  $region5: #{theory_forward.1} parent=0 // pred_fallthru
    _
  // Predicated region
  $region6: #{theory_forward.1} parent=0 // pred_check
    _
  $region7: #{theory_forward.1} parent=0 // pred_check_branch
    %10 = sbr.rel (0) target = $region9
  $region8: #{theory_forward.1} parent=0 // pred_region
    _
  $region9: #{theory_forward.1} parent=0 // pred_fallthru
    _
  %v11 = vld [vmem:[%s0] sm:$0xff]
  %v12 = vld [vmem:[%s1] sm:$0xff]
  %v13 = vld [vmem:[%s1 + $0x8] sm:$0xff]
  %v14 = vld [vmem:[%s1 + $0x10] sm:$0xff]
  %v15 = vld [vmem:[%s1 + $0x18] sm:$0x1]
  %v16 = vld [vmem:[%s1 + $0x20] sm:$0x1]
  %v17 = vld [vmem:[%s1 + $0x28] sm:$0x1]
  %vm18 = vcmask 72704
  %v20 = vsel %vm18, %v11, 0
  %vm22 = vcmask 1040384
  %v24 = vsel %vm22, %v15, 0
  %v27 = vsel %vm22, %v16, 0
  %v30 = vsel %vm22, %v17, 0
  %32 = vmatpush.msra.mxu0 0.0
  %33 = vmatpush.msra.mxu0 0.0
  %34 = vmatpush.msra.mxu0 0.0
  %35 = vmatpush.msra.mxu0 0.0
  %36 = vmatpush.msra.mxu0 0.0
  %37 = vmatpush.msra.mxu0 0.0
  %38 = vmatpush.msra.mxu0 0.0
  %39 = vmatpush.msra.mxu0 0.0
  %40 = vmatpush.msra.mxu0 0.0
  %41 = vmatpush.msra.mxu0 0.0
  %42 = vmatpush.msra.mxu0 0.0
  %43 = vmatpush.msra.mxu0 0.0
  %44 = vmatpush.msra.mxu0 0.0
  %45 = vmatpush.msra.mxu0 0.0
  %v46 = vand.u32 %v24, 4294901760
  %47 = vmatpush.msra.mxu0 %v46
  %v48 = vand.u32 %v12, 4294901760
  %49 = vmatpush.msra.mxu0 %v48
  %v50 = vand.u32 %v20, 4294901760
  %v51 = vsub.f32 %v20, %v50
  %v52 = vand.u32 %v51, 4294901760
  %v53 = vsub.f32 %v51, %v52
  %v54 = vand.u32 %v53, 4294901760
  %55 = vmatmul.f32.gmra.mxu0 %v54
  %v56 = vpop.f32.mrf.mxu0
  %v57 = vadd.f32 0.0, %v56
  %58 = vdwg.mxu0
  %59 = vmatpush.msra.mxu0 0.0
  %60 = vmatpush.msra.mxu0 0.0
  %61 = vmatpush.msra.mxu0 0.0
  %62 = vmatpush.msra.mxu0 0.0
  %63 = vmatpush.msra.mxu0 0.0
  %64 = vmatpush.msra.mxu0 0.0
  %65 = vmatpush.msra.mxu0 0.0
  %66 = vmatpush.msra.mxu0 0.0
  %67 = vmatpush.msra.mxu0 0.0
  %68 = vmatpush.msra.mxu0 0.0
  %69 = vmatpush.msra.mxu0 0.0
  %70 = vmatpush.msra.mxu0 0.0
  %71 = vmatpush.msra.mxu0 0.0
  %72 = vmatpush.msra.mxu0 0.0
  %v73 = vand.u32 %v24, 4294901760
  %v74 = vsub.f32 %v24, %v73
  %v75 = vand.u32 %v74, 4294901760
  %v76 = vsub.f32 %v74, %v75
  %v77 = vand.u32 %v76, 4294901760
  %78 = vmatpush.msra.mxu0 %v77
  %v79 = vand.u32 %v12, 4294901760
  %v80 = vsub.f32 %v12, %v79
  %v81 = vand.u32 %v80, 4294901760
  %v82 = vsub.f32 %v80, %v81
  %v83 = vand.u32 %v82, 4294901760
  %84 = vmatpush.msra.mxu0 %v83
  %v85 = vand.u32 %v20, 4294901760
  %86 = vmatmul.f32.gmra.mxu0 %v85
  %v87 = vpop.f32.mrf.mxu0
  %v88 = vadd.f32 %v57, %v87
  %89 = vdwg.mxu0
  %90 = vmatpush.msra.mxu0 0.0
  %91 = vmatpush.msra.mxu0 0.0
  %92 = vmatpush.msra.mxu0 0.0
  %93 = vmatpush.msra.mxu0 0.0
  %94 = vmatpush.msra.mxu0 0.0
  %95 = vmatpush.msra.mxu0 0.0
  %96 = vmatpush.msra.mxu0 0.0
  %97 = vmatpush.msra.mxu0 0.0
  %98 = vmatpush.msra.mxu0 0.0
  %99 = vmatpush.msra.mxu0 0.0
  %100 = vmatpush.msra.mxu0 0.0
  %101 = vmatpush.msra.mxu0 0.0
  %102 = vmatpush.msra.mxu0 0.0
  %103 = vmatpush.msra.mxu0 0.0
  %v104 = vand.u32 %v24, 4294901760
  %v105 = vsub.f32 %v24, %v104
  %106 = vmatpush.msra.mxu0 %v105
  %v107 = vand.u32 %v12, 4294901760
  %v108 = vsub.f32 %v12, %v107
  %109 = vmatpush.msra.mxu0 %v108
  %v110 = vand.u32 %v20, 4294901760
  %v111 = vsub.f32 %v20, %v110
  %112 = vmatmul.f32.gmra.mxu0 %v111
  %v113 = vpop.f32.mrf.mxu0
  %v114 = vadd.f32 %v88, %v113
  %115 = vdwg.mxu0
  %116 = vmatpush.msra.mxu0 0.0
  %117 = vmatpush.msra.mxu0 0.0
  %118 = vmatpush.msra.mxu0 0.0
  %119 = vmatpush.msra.mxu0 0.0
  %120 = vmatpush.msra.mxu0 0.0
  %121 = vmatpush.msra.mxu0 0.0
  %122 = vmatpush.msra.mxu0 0.0
  %123 = vmatpush.msra.mxu0 0.0
  %124 = vmatpush.msra.mxu0 0.0
  %125 = vmatpush.msra.mxu0 0.0
  %126 = vmatpush.msra.mxu0 0.0
  %127 = vmatpush.msra.mxu0 0.0
  %128 = vmatpush.msra.mxu0 0.0
  %129 = vmatpush.msra.mxu0 0.0
  %v130 = vand.u32 %v24, 4294901760
  %131 = vmatpush.msra.mxu0 %v130
  %v132 = vand.u32 %v12, 4294901760
  %133 = vmatpush.msra.mxu0 %v132
  %v134 = vand.u32 %v20, 4294901760
  %v135 = vsub.f32 %v20, %v134
  %v136 = vand.u32 %v135, 4294901760
  %137 = vmatmul.f32.gmra.mxu0 %v136
  %v138 = vpop.f32.mrf.mxu0
  %v139 = vadd.f32 %v114, %v138
  %140 = vdwg.mxu0
  %141 = vmatpush.msra.mxu0 0.0
  %142 = vmatpush.msra.mxu0 0.0
  %143 = vmatpush.msra.mxu0 0.0
  %144 = vmatpush.msra.mxu0 0.0
  %145 = vmatpush.msra.mxu0 0.0
  %146 = vmatpush.msra.mxu0 0.0
  %147 = vmatpush.msra.mxu0 0.0
  %148 = vmatpush.msra.mxu0 0.0
  %149 = vmatpush.msra.mxu0 0.0
  %150 = vmatpush.msra.mxu0 0.0
  %151 = vmatpush.msra.mxu0 0.0
  %152 = vmatpush.msra.mxu0 0.0
  %153 = vmatpush.msra.mxu0 0.0
  %154 = vmatpush.msra.mxu0 0.0
  %v155 = vand.u32 %v24, 4294901760
  %v156 = vsub.f32 %v24, %v155
  %v157 = vand.u32 %v156, 4294901760
  %158 = vmatpush.msra.mxu0 %v157
  %v159 = vand.u32 %v12, 4294901760
  %v160 = vsub.f32 %v12, %v159
  %v161 = vand.u32 %v160, 4294901760
  %162 = vmatpush.msra.mxu0 %v161
  %v163 = vand.u32 %v20, 4294901760
  %164 = vmatmul.f32.gmra.mxu0 %v163
  %v165 = vpop.f32.mrf.mxu0
  %v166 = vadd.f32 %v139, %v165
  %167 = vdwg.mxu0
  %168 = vmatpush.msra.mxu0 0.0
  %169 = vmatpush.msra.mxu0 0.0
  %170 = vmatpush.msra.mxu0 0.0
  %171 = vmatpush.msra.mxu0 0.0
  %172 = vmatpush.msra.mxu0 0.0
  %173 = vmatpush.msra.mxu0 0.0
  %174 = vmatpush.msra.mxu0 0.0
  %175 = vmatpush.msra.mxu0 0.0
  %176 = vmatpush.msra.mxu0 0.0
  %177 = vmatpush.msra.mxu0 0.0
  %178 = vmatpush.msra.mxu0 0.0
  %179 = vmatpush.msra.mxu0 0.0
  %180 = vmatpush.msra.mxu0 0.0
  %181 = vmatpush.msra.mxu0 0.0
  %v182 = vand.u32 %v24, 4294901760
  %183 = vmatpush.msra.mxu0 %v182
  %v184 = vand.u32 %v12, 4294901760
  %185 = vmatpush.msra.mxu0 %v184
  %v186 = vand.u32 %v20, 4294901760
  %187 = vmatmul.f32.gmra.mxu0 %v186
  %v188 = vpop.f32.mrf.mxu0
  %v189 = vadd.f32 %v166, %v188
  %190 = vdwg.mxu0
  %191 = vmatpush.msra.mxu0 0.0
  %192 = vmatpush.msra.mxu0 0.0
  %193 = vmatpush.msra.mxu0 0.0
  %194 = vmatpush.msra.mxu0 0.0
  %195 = vmatpush.msra.mxu0 0.0
  %196 = vmatpush.msra.mxu0 0.0
  %197 = vmatpush.msra.mxu0 0.0
  %198 = vmatpush.msra.mxu0 0.0
  %199 = vmatpush.msra.mxu0 0.0
  %200 = vmatpush.msra.mxu0 0.0
  %201 = vmatpush.msra.mxu0 0.0
  %202 = vmatpush.msra.mxu0 0.0
  %203 = vmatpush.msra.mxu0 0.0
  %204 = vmatpush.msra.mxu0 0.0
  %v205 = vand.u32 %v27, 4294901760
  %206 = vmatpush.msra.mxu0 %v205
  %v207 = vand.u32 %v13, 4294901760
  %208 = vmatpush.msra.mxu0 %v207
  %v209 = vand.u32 %v20, 4294901760
  %v210 = vsub.f32 %v20, %v209
  %v211 = vand.u32 %v210, 4294901760
  %v212 = vsub.f32 %v210, %v211
  %v213 = vand.u32 %v212, 4294901760
  %214 = vmatmul.f32.gmra.mxu0 %v213
  %v215 = vpop.f32.mrf.mxu0
  %v216 = vadd.f32 0.0, %v215
  %217 = vdwg.mxu0
  %218 = vmatpush.msra.mxu0 0.0
  %219 = vmatpush.msra.mxu0 0.0
  %220 = vmatpush.msra.mxu0 0.0
  %221 = vmatpush.msra.mxu0 0.0
  %222 = vmatpush.msra.mxu0 0.0
  %223 = vmatpush.msra.mxu0 0.0
  %224 = vmatpush.msra.mxu0 0.0
  %225 = vmatpush.msra.mxu0 0.0
  %226 = vmatpush.msra.mxu0 0.0
  %227 = vmatpush.msra.mxu0 0.0
  %228 = vmatpush.msra.mxu0 0.0
  %229 = vmatpush.msra.mxu0 0.0
  %230 = vmatpush.msra.mxu0 0.0
  %231 = vmatpush.msra.mxu0 0.0
  %v232 = vand.u32 %v27, 4294901760
  %v233 = vsub.f32 %v27, %v232
  %v234 = vand.u32 %v233, 4294901760
  %v235 = vsub.f32 %v233, %v234
  %v236 = vand.u32 %v235, 4294901760
  %237 = vmatpush.msra.mxu0 %v236
  %v238 = vand.u32 %v13, 4294901760
  %v239 = vsub.f32 %v13, %v238
  %v240 = vand.u32 %v239, 4294901760
  %v241 = vsub.f32 %v239, %v240
  %v242 = vand.u32 %v241, 4294901760
  %243 = vmatpush.msra.mxu0 %v242
  %v244 = vand.u32 %v20, 4294901760
  %245 = vmatmul.f32.gmra.mxu0 %v244
  %v246 = vpop.f32.mrf.mxu0
  %v247 = vadd.f32 %v216, %v246
  %248 = vdwg.mxu0
  %249 = vmatpush.msra.mxu0 0.0
  %250 = vmatpush.msra.mxu0 0.0
  %251 = vmatpush.msra.mxu0 0.0
  %252 = vmatpush.msra.mxu0 0.0
  %253 = vmatpush.msra.mxu0 0.0
  %254 = vmatpush.msra.mxu0 0.0
  %255 = vmatpush.msra.mxu0 0.0
  %256 = vmatpush.msra.mxu0 0.0
  %257 = vmatpush.msra.mxu0 0.0
  %258 = vmatpush.msra.mxu0 0.0
  %259 = vmatpush.msra.mxu0 0.0
  %260 = vmatpush.msra.mxu0 0.0
  %261 = vmatpush.msra.mxu0 0.0
  %262 = vmatpush.msra.mxu0 0.0
  %v263 = vand.u32 %v27, 4294901760
  %v264 = vsub.f32 %v27, %v263
  %265 = vmatpush.msra.mxu0 %v264
  %v266 = vand.u32 %v13, 4294901760
  %v267 = vsub.f32 %v13, %v266
  %268 = vmatpush.msra.mxu0 %v267
  %v269 = vand.u32 %v20, 4294901760
  %v270 = vsub.f32 %v20, %v269
  %271 = vmatmul.f32.gmra.mxu0 %v270
  %v272 = vpop.f32.mrf.mxu0
  %v273 = vadd.f32 %v247, %v272
  %274 = vdwg.mxu0
  %275 = vmatpush.msra.mxu0 0.0
  %276 = vmatpush.msra.mxu0 0.0
  %277 = vmatpush.msra.mxu0 0.0
  %278 = vmatpush.msra.mxu0 0.0
  %279 = vmatpush.msra.mxu0 0.0
  %280 = vmatpush.msra.mxu0 0.0
  %281 = vmatpush.msra.mxu0 0.0
  %282 = vmatpush.msra.mxu0 0.0
  %283 = vmatpush.msra.mxu0 0.0
  %284 = vmatpush.msra.mxu0 0.0
  %285 = vmatpush.msra.mxu0 0.0
  %286 = vmatpush.msra.mxu0 0.0
  %287 = vmatpush.msra.mxu0 0.0
  %288 = vmatpush.msra.mxu0 0.0
  %v289 = vand.u32 %v27, 4294901760
  %290 = vmatpush.msra.mxu0 %v289
  %v291 = vand.u32 %v13, 4294901760
  %292 = vmatpush.msra.mxu0 %v291
  %v293 = vand.u32 %v20, 4294901760
  %v294 = vsub.f32 %v20, %v293
  %v295 = vand.u32 %v294, 4294901760
  %296 = vmatmul.f32.gmra.mxu0 %v295
  %v297 = vpop.f32.mrf.mxu0
  %v298 = vadd.f32 %v273, %v297
  %299 = vdwg.mxu0
  %300 = vmatpush.msra.mxu0 0.0
  %301 = vmatpush.msra.mxu0 0.0
  %302 = vmatpush.msra.mxu0 0.0
  %303 = vmatpush.msra.mxu0 0.0
  %304 = vmatpush.msra.mxu0 0.0
  %305 = vmatpush.msra.mxu0 0.0
  %306 = vmatpush.msra.mxu0 0.0
  %307 = vmatpush.msra.mxu0 0.0
  %308 = vmatpush.msra.mxu0 0.0
  %309 = vmatpush.msra.mxu0 0.0
  %310 = vmatpush.msra.mxu0 0.0
  %311 = vmatpush.msra.mxu0 0.0
  %312 = vmatpush.msra.mxu0 0.0
  %313 = vmatpush.msra.mxu0 0.0
  %v314 = vand.u32 %v27, 4294901760
  %v315 = vsub.f32 %v27, %v314
  %v316 = vand.u32 %v315, 4294901760
  %317 = vmatpush.msra.mxu0 %v316
  %v318 = vand.u32 %v13, 4294901760
  %v319 = vsub.f32 %v13, %v318
  %v320 = vand.u32 %v319, 4294901760
  %321 = vmatpush.msra.mxu0 %v320
  %v322 = vand.u32 %v20, 4294901760
  %323 = vmatmul.f32.gmra.mxu0 %v322
  %v324 = vpop.f32.mrf.mxu0
  %v325 = vadd.f32 %v298, %v324
  %326 = vdwg.mxu0
  %327 = vmatpush.msra.mxu0 0.0
  %328 = vmatpush.msra.mxu0 0.0
  %329 = vmatpush.msra.mxu0 0.0
  %330 = vmatpush.msra.mxu0 0.0
  %331 = vmatpush.msra.mxu0 0.0
  %332 = vmatpush.msra.mxu0 0.0
  %333 = vmatpush.msra.mxu0 0.0
  %334 = vmatpush.msra.mxu0 0.0
  %335 = vmatpush.msra.mxu0 0.0
  %336 = vmatpush.msra.mxu0 0.0
  %337 = vmatpush.msra.mxu0 0.0
  %338 = vmatpush.msra.mxu0 0.0
  %339 = vmatpush.msra.mxu0 0.0
  %340 = vmatpush.msra.mxu0 0.0
  %v341 = vand.u32 %v27, 4294901760
  %342 = vmatpush.msra.mxu0 %v341
  %v343 = vand.u32 %v13, 4294901760
  %344 = vmatpush.msra.mxu0 %v343
  %v345 = vand.u32 %v20, 4294901760
  %346 = vmatmul.f32.gmra.mxu0 %v345
  %v347 = vpop.f32.mrf.mxu0
  %v348 = vadd.f32 %v325, %v347
  %349 = vdwg.mxu0
  %350 = vmatpush.msra.mxu0 0.0
  %351 = vmatpush.msra.mxu0 0.0
  %352 = vmatpush.msra.mxu0 0.0
  %353 = vmatpush.msra.mxu0 0.0
  %354 = vmatpush.msra.mxu0 0.0
  %355 = vmatpush.msra.mxu0 0.0
  %356 = vmatpush.msra.mxu0 0.0
  %357 = vmatpush.msra.mxu0 0.0
  %358 = vmatpush.msra.mxu0 0.0
  %359 = vmatpush.msra.mxu0 0.0
  %360 = vmatpush.msra.mxu0 0.0
  %361 = vmatpush.msra.mxu0 0.0
  %362 = vmatpush.msra.mxu0 0.0
  %363 = vmatpush.msra.mxu0 0.0
  %v364 = vand.u32 %v30, 4294901760
  %365 = vmatpush.msra.mxu0 %v364
  %v366 = vand.u32 %v14, 4294901760
  %367 = vmatpush.msra.mxu0 %v366
  %v368 = vand.u32 %v20, 4294901760
  %v369 = vsub.f32 %v20, %v368
  %v370 = vand.u32 %v369, 4294901760
  %v371 = vsub.f32 %v369, %v370
  %v372 = vand.u32 %v371, 4294901760
  %373 = vmatmul.f32.gmra.mxu0 %v372
  %v374 = vpop.f32.mrf.mxu0
  %v375 = vadd.f32 0.0, %v374
  %376 = vdwg.mxu0
  %377 = vmatpush.msra.mxu0 0.0
  %378 = vmatpush.msra.mxu0 0.0
  %379 = vmatpush.msra.mxu0 0.0
  %380 = vmatpush.msra.mxu0 0.0
  %381 = vmatpush.msra.mxu0 0.0
  %382 = vmatpush.msra.mxu0 0.0
  %383 = vmatpush.msra.mxu0 0.0
  %384 = vmatpush.msra.mxu0 0.0
  %385 = vmatpush.msra.mxu0 0.0
  %386 = vmatpush.msra.mxu0 0.0
  %387 = vmatpush.msra.mxu0 0.0
  %388 = vmatpush.msra.mxu0 0.0
  %389 = vmatpush.msra.mxu0 0.0
  %390 = vmatpush.msra.mxu0 0.0
  %v391 = vand.u32 %v30, 4294901760
  %v392 = vsub.f32 %v30, %v391
  %v393 = vand.u32 %v392, 4294901760
  %v394 = vsub.f32 %v392, %v393
  %v395 = vand.u32 %v394, 4294901760
  %396 = vmatpush.msra.mxu0 %v395
  %v397 = vand.u32 %v14, 4294901760
  %v398 = vsub.f32 %v14, %v397
  %v399 = vand.u32 %v398, 4294901760
  %v400 = vsub.f32 %v398, %v399
  %v401 = vand.u32 %v400, 4294901760
  %402 = vmatpush.msra.mxu0 %v401
  %v403 = vand.u32 %v20, 4294901760
  %404 = vmatmul.f32.gmra.mxu0 %v403
  %v405 = vpop.f32.mrf.mxu0
  %v406 = vadd.f32 %v375, %v405
  %407 = vdwg.mxu0
  %408 = vmatpush.msra.mxu0 0.0
  %409 = vmatpush.msra.mxu0 0.0
  %410 = vmatpush.msra.mxu0 0.0
  %411 = vmatpush.msra.mxu0 0.0
  %412 = vmatpush.msra.mxu0 0.0
  %413 = vmatpush.msra.mxu0 0.0
  %414 = vmatpush.msra.mxu0 0.0
  %415 = vmatpush.msra.mxu0 0.0
  %416 = vmatpush.msra.mxu0 0.0
  %417 = vmatpush.msra.mxu0 0.0
  %418 = vmatpush.msra.mxu0 0.0
  %419 = vmatpush.msra.mxu0 0.0
  %420 = vmatpush.msra.mxu0 0.0
  %421 = vmatpush.msra.mxu0 0.0
  %v422 = vand.u32 %v30, 4294901760
  %v423 = vsub.f32 %v30, %v422
  %424 = vmatpush.msra.mxu0 %v423
  %v425 = vand.u32 %v14, 4294901760
  %v426 = vsub.f32 %v14, %v425
  %427 = vmatpush.msra.mxu0 %v426
  %v428 = vand.u32 %v20, 4294901760
  %v429 = vsub.f32 %v20, %v428
  %430 = vmatmul.f32.gmra.mxu0 %v429
  %v431 = vpop.f32.mrf.mxu0
  %v432 = vadd.f32 %v406, %v431
  %433 = vdwg.mxu0
  %434 = vmatpush.msra.mxu0 0.0
  %435 = vmatpush.msra.mxu0 0.0
  %436 = vmatpush.msra.mxu0 0.0
  %437 = vmatpush.msra.mxu0 0.0
  %438 = vmatpush.msra.mxu0 0.0
  %439 = vmatpush.msra.mxu0 0.0
  %440 = vmatpush.msra.mxu0 0.0
  %441 = vmatpush.msra.mxu0 0.0
  %442 = vmatpush.msra.mxu0 0.0
  %443 = vmatpush.msra.mxu0 0.0
  %444 = vmatpush.msra.mxu0 0.0
  %445 = vmatpush.msra.mxu0 0.0
  %446 = vmatpush.msra.mxu0 0.0
  %447 = vmatpush.msra.mxu0 0.0
  %v448 = vand.u32 %v30, 4294901760
  %449 = vmatpush.msra.mxu0 %v448
  %v450 = vand.u32 %v14, 4294901760
  %451 = vmatpush.msra.mxu0 %v450
  %v452 = vand.u32 %v20, 4294901760
  %v453 = vsub.f32 %v20, %v452
  %v454 = vand.u32 %v453, 4294901760
  %455 = vmatmul.f32.gmra.mxu0 %v454
  %v456 = vpop.f32.mrf.mxu0
  %v457 = vadd.f32 %v432, %v456
  %458 = vdwg.mxu0
  %459 = vmatpush.msra.mxu0 0.0
  %460 = vmatpush.msra.mxu0 0.0
  %461 = vmatpush.msra.mxu0 0.0
  %462 = vmatpush.msra.mxu0 0.0
  %463 = vmatpush.msra.mxu0 0.0
  %464 = vmatpush.msra.mxu0 0.0
  %465 = vmatpush.msra.mxu0 0.0
  %466 = vmatpush.msra.mxu0 0.0
  %467 = vmatpush.msra.mxu0 0.0
  %468 = vmatpush.msra.mxu0 0.0
  %469 = vmatpush.msra.mxu0 0.0
  %470 = vmatpush.msra.mxu0 0.0
  %471 = vmatpush.msra.mxu0 0.0
  %472 = vmatpush.msra.mxu0 0.0
  %v473 = vand.u32 %v30, 4294901760
  %v474 = vsub.f32 %v30, %v473
  %v475 = vand.u32 %v474, 4294901760
  %476 = vmatpush.msra.mxu0 %v475
  %v477 = vand.u32 %v14, 4294901760
  %v478 = vsub.f32 %v14, %v477
  %v479 = vand.u32 %v478, 4294901760
  %480 = vmatpush.msra.mxu0 %v479
  %v481 = vand.u32 %v20, 4294901760
  %482 = vmatmul.f32.gmra.mxu0 %v481
  %v483 = vpop.f32.mrf.mxu0
  %v484 = vadd.f32 %v457, %v483
  %485 = vdwg.mxu0
  %486 = vmatpush.msra.mxu0 0.0
  %487 = vmatpush.msra.mxu0 0.0
  %488 = vmatpush.msra.mxu0 0.0
  %489 = vmatpush.msra.mxu0 0.0
  %490 = vmatpush.msra.mxu0 0.0
  %491 = vmatpush.msra.mxu0 0.0
  %492 = vmatpush.msra.mxu0 0.0
  %493 = vmatpush.msra.mxu0 0.0
  %494 = vmatpush.msra.mxu0 0.0
  %495 = vmatpush.msra.mxu0 0.0
  %496 = vmatpush.msra.mxu0 0.0
  %497 = vmatpush.msra.mxu0 0.0
  %498 = vmatpush.msra.mxu0 0.0
  %499 = vmatpush.msra.mxu0 0.0
  %v500 = vand.u32 %v30, 4294901760
  %501 = vmatpush.msra.mxu0 %v500
  %v502 = vand.u32 %v14, 4294901760
  %503 = vmatpush.msra.mxu0 %v502
  %v504 = vand.u32 %v20, 4294901760
  %505 = vmatmul.f32.gmra.mxu0 %v504
  %v506 = vpop.f32.mrf.mxu0
  %v507 = vadd.f32 %v484, %v506
  %508 = vdwg.mxu0
  %v509 = vand.u32 2147483647, %v189
  %vm510 = vcmp.le.f32.partialorder %v509, 0.7853982
  %vm511 = vcmp.lt.s32.totalorder %v189, 0
  %v512 = vand.u32 %v189, 2139095040
  %v513 = vshrl.u32 %v512, 23
  %v514 = vsub.s32 %v513, 127
  %v515 = vand.u32 2147483647, %v189
  %v516 = vand.u32 %v515, 8388607
  %v517 = vor.u32 %v516, 8388608
  %v518 = vsub.s32 0, %v517
  %v519 = vadd.s32 %v514, 1
  %vm520 = vcmp.gt.s32.totalorder %v519, 0
  %v521 = vsel %vm520, %v519, 0
  %v522 = vshrl.u32 %v521, 5
  %v523 = vand.u32 %v521, 31
  %v524 = vsub.s32 32, %v523
  %v525 = vshrl.u32 683565275, %v524
  %v526 = vshll.u32 683565275, %v523
  %v527 = vshrl.u32 2475754826, %v524
  %v528 = vor.u32 %v526, %v527
  %v529 = vshll.u32 2475754826, %v523
  %v530 = vshrl.u32 2131351028, %v524
  %v531 = vor.u32 %v529, %v530
  %v532 = vshll.u32 2131351028, %v523
  %v533 = vshrl.u32 2102212464, %v524
  %v534 = vor.u32 %v532, %v533
  %v535 = vshll.u32 2102212464, %v523
  %v536 = vshrl.u32 920167782, %v524
  %v537 = vor.u32 %v535, %v536
  %v538 = vshll.u32 920167782, %v523
  %v539 = vshrl.u32 1326507024, %v524
  %v540 = vor.u32 %v538, %v539
  %vm541 = vcmp.lt.s32.totalorder %v522, 1
  %vm542 = vcmp.lt.s32.totalorder %v522, 2
  %vm543 = vcmp.lt.s32.totalorder %v522, 3
  %vm544 = vcmp.lt.s32.totalorder %v522, 4
  %v545 = vsel %vm541, %v525, %v528
  %v546 = vsel %vm544, %v534, 2102212464
  %v547 = vsel %vm543, %v531, %v546
  %v548 = vsel %vm542, %v545, %v547
  %v549 = vsel %vm541, %v528, %v531
  %v550 = vsel %vm544, %v537, 920167782
  %v551 = vsel %vm543, %v534, %v550
  %v552 = vsel %vm542, %v549, %v551
  %v553 = vsel %vm541, %v531, %v534
  %v554 = vsel %vm544, %v540, 1326507024
  %v555 = vsel %vm543, %v537, %v554
  %v556 = vsel %vm542, %v553, %v555
  %v557 = vshll.u32 %v517, 8
  %v558 = vand.u32 %v557, 65535
  %v559 = vshrl.u32 %v557, 16
  %v560 = vand.u32 %v556, 65535
  %v561 = vshrl.u32 %v556, 16
  %v562 = vmul.u32 %v558, %v560
  %v563 = vmul.u32 %v558, %v561
  %v564 = vmul.u32 %v559, %v560
  %v565 = vmul.u32 %v559, %v561
  %v566 = vshll.u32 %v563, 16
  %v567 = vshrl.u32 %v563, 16
  %v568 = vshll.u32 %v564, 16
  %v569 = vshrl.u32 %v564, 16
  %vm570 = vc.u32 %v562, %v566
  %v571 = vsel %vm570, 1, 0
  %v572 = vadd.s32 %v562, %v566
  %v573 = vadd.s32 %v565, %v571
  %vm574 = vc.u32 %v572, %v568
  %v575 = vsel %vm574, 1, 0
  %v576 = vadd.s32 %v572, %v568
  %v577 = vadd.s32 %v573, %v575
  %v578 = vadd.s32 %v577, %v567
  %v579 = vadd.s32 %v578, %v569
  %v580 = vand.u32 %v557, 65535
  %v581 = vshrl.u32 %v557, 16
  %v582 = vand.u32 %v552, 65535
  %v583 = vshrl.u32 %v552, 16
  %v584 = vmul.u32 %v580, %v582
  %v585 = vmul.u32 %v580, %v583
  %v586 = vmul.u32 %v581, %v582
  %v587 = vmul.u32 %v581, %v583
  %v588 = vshll.u32 %v585, 16
  %v589 = vshrl.u32 %v585, 16
  %v590 = vshll.u32 %v586, 16
  %v591 = vshrl.u32 %v586, 16
  %vm592 = vc.u32 %v584, %v588
  %v593 = vsel %vm592, 1, 0
  %v594 = vadd.s32 %v584, %v588
  %v595 = vadd.s32 %v587, %v593
  %vm596 = vc.u32 %v594, %v590
  %v597 = vsel %vm596, 1, 0
  %v598 = vadd.s32 %v594, %v590
  %v599 = vadd.s32 %v595, %v597
  %v600 = vadd.s32 %v599, %v589
  %v601 = vadd.s32 %v600, %v591
  %v602 = vmul.u32 %v557, %v548
  %v603 = vadd.s32 %v579, %v598
  %vm604 = vc.u32 %v579, %v598
  %v605 = vadd.s32 %v601, 1
  %v606 = vsel %vm604, %v605, %v601
  %v607 = vadd.s32 %v602, %v606
  %v608 = vadd.s32 %v607, 536870912
  %v609 = vshrl.u32 %v608, 30
  %v610 = vshll.u32 %v609, 30
  %v611 = vsub.s32 %v607, %v610
  %vm612 = vcmp.lt.s32.totalorder %v611, 0
  %v613 = vsub.s32 0, %v611
  %v614 = vsel %vm612, %v613, %v611
  %v615 = vclz %v614
  %v616 = vsub.s32 %v615, 2
  %vm617 = vcmp.gt.s32.totalorder 0, %v616
  %v618 = vsel %vm617, 0, %v616
  %v619 = vsub.s32 32, %v618
  %v620 = vshll.u32 %v611, %v618
  %v621 = vshrl.u32 %v603, %v619
  %v622 = vor.u32 %v620, %v621
  %v623 = vsub.s32 4294967266, %v618
  %v624 = vadd.s32 %v623, 127
  %v625 = vshll.u32 %v624, 23
  %v626 = vor.u32 4788187, %v625
  %v627 = vand.u32 2147483647, %v626
  %v629 = vcvt.s32.f32 %v622
  %v630 = vmul.f32 %v629, %v627
  %v631 = vxor.u32 %v630, 2147483648
  %v632 = vsel %vm511, %v631, %v630
  %v633 = vsub.s32 4, %v609
  %v634 = vsel %vm511, %v633, %v609
  %v635 = vsel %vm510, %v189, %v632
  %v636 = vsel %vm510, 0, %v634
  %v637 = vmul.f32 %v635, %v635
  %v638 = vmul.f32 %v637, -0.001358992
  %v639 = vadd.f32 %v638, 0.041655596
  %v640 = vmul.f32 %v637, %v639
  %v641 = vadd.f32 %v640, -0.4999988
  %v642 = vmul.f32 %v637, %v641
  %v643 = vadd.f32 1.0, %v642
  %v644 = vmul.f32 %v635, %v635
  %v645 = vmul.f32 %v644, -0.00019511016
  %v646 = vadd.f32 %v645, 0.008332121
  %v647 = vmul.f32 %v644, %v646
  %v648 = vadd.f32 %v647, -0.16666654
  %v649 = vmul.f32 %v644, %v648
  %v650 = vadd.f32 %v649, 1.0
  %v651 = vmul.f32 %v650, %v635
  %vm652 = vweird.f32 %v189
  %v653 = vadd.s32 %v636, 3
  %v654 = vand.u32 %v653, 3
  %vm655 = vcmp.lt.s32.totalorder %v654, 2
  %vm656 = vcmp.eq.s32.totalorder %v654, 0
  %v657 = vxor.u32 %v651, 2147483648
  %v658 = vsel %vm656, %v643, %v657
  %vm659 = vcmp.eq.s32.totalorder %v654, 2
  %v660 = vxor.u32 %v643, 2147483648
  %v661 = vsel %vm659, %v660, %v651
  %v662 = vsel %vm655, %v658, %v661
  %v663 = vsel %vm652, nan, %v662
  %v664 = vand.u32 2147483647, %v348
  %vm665 = vcmp.le.f32.partialorder %v664, 0.7853982
  %vm666 = vcmp.lt.s32.totalorder %v348, 0
  %v667 = vand.u32 %v348, 2139095040
  %v668 = vshrl.u32 %v667, 23
  %v669 = vsub.s32 %v668, 127
  %v670 = vand.u32 2147483647, %v348
  %v671 = vand.u32 %v670, 8388607
  %v672 = vor.u32 %v671, 8388608
  %v673 = vsub.s32 0, %v672
  %v674 = vadd.s32 %v669, 1
  %vm675 = vcmp.gt.s32.totalorder %v674, 0
  %v676 = vsel %vm675, %v674, 0
  %v677 = vshrl.u32 %v676, 5
  %v678 = vand.u32 %v676, 31
  %v679 = vsub.s32 32, %v678
  %v680 = vshrl.u32 683565275, %v679
  %v681 = vshll.u32 683565275, %v678
  %v682 = vshrl.u32 2475754826, %v679
  %v683 = vor.u32 %v681, %v682
  %v684 = vshll.u32 2475754826, %v678
  %v685 = vshrl.u32 2131351028, %v679
  %v686 = vor.u32 %v684, %v685
  %v687 = vshll.u32 2131351028, %v678
  %v688 = vshrl.u32 2102212464, %v679
  %v689 = vor.u32 %v687, %v688
  %v690 = vshll.u32 2102212464, %v678
  %v691 = vshrl.u32 920167782, %v679
  %v692 = vor.u32 %v690, %v691
  %v693 = vshll.u32 920167782, %v678
  %v694 = vshrl.u32 1326507024, %v679
  %v695 = vor.u32 %v693, %v694
  %vm696 = vcmp.lt.s32.totalorder %v677, 1
  %vm697 = vcmp.lt.s32.totalorder %v677, 2
  %vm698 = vcmp.lt.s32.totalorder %v677, 3
  %vm699 = vcmp.lt.s32.totalorder %v677, 4
  %v700 = vsel %vm696, %v680, %v683
  %v701 = vsel %vm699, %v689, 2102212464
  %v702 = vsel %vm698, %v686, %v701
  %v703 = vsel %vm697, %v700, %v702
  %v704 = vsel %vm696, %v683, %v686
  %v705 = vsel %vm699, %v692, 920167782
  %v706 = vsel %vm698, %v689, %v705
  %v707 = vsel %vm697, %v704, %v706
  %v708 = vsel %vm696, %v686, %v689
  %v709 = vsel %vm699, %v695, 1326507024
  %v710 = vsel %vm698, %v692, %v709
  %v711 = vsel %vm697, %v708, %v710
  %v712 = vshll.u32 %v672, 8
  %v713 = vand.u32 %v712, 65535
  %v714 = vshrl.u32 %v712, 16
  %v715 = vand.u32 %v711, 65535
  %v716 = vshrl.u32 %v711, 16
  %v717 = vmul.u32 %v713, %v715
  %v718 = vmul.u32 %v713, %v716
  %v719 = vmul.u32 %v714, %v715
  %v720 = vmul.u32 %v714, %v716
  %v721 = vshll.u32 %v718, 16
  %v722 = vshrl.u32 %v718, 16
  %v723 = vshll.u32 %v719, 16
  %v724 = vshrl.u32 %v719, 16
  %vm725 = vc.u32 %v717, %v721
  %v726 = vsel %vm725, 1, 0
  %v727 = vadd.s32 %v717, %v721
  %v728 = vadd.s32 %v720, %v726
  %vm729 = vc.u32 %v727, %v723
  %v730 = vsel %vm729, 1, 0
  %v731 = vadd.s32 %v727, %v723
  %v732 = vadd.s32 %v728, %v730
  %v733 = vadd.s32 %v732, %v722
  %v734 = vadd.s32 %v733, %v724
  %v735 = vand.u32 %v712, 65535
  %v736 = vshrl.u32 %v712, 16
  %v737 = vand.u32 %v707, 65535
  %v738 = vshrl.u32 %v707, 16
  %v739 = vmul.u32 %v735, %v737
  %v740 = vmul.u32 %v735, %v738
  %v741 = vmul.u32 %v736, %v737
  %v742 = vmul.u32 %v736, %v738
  %v743 = vshll.u32 %v740, 16
  %v744 = vshrl.u32 %v740, 16
  %v745 = vshll.u32 %v741, 16
  %v746 = vshrl.u32 %v741, 16
  %vm747 = vc.u32 %v739, %v743
  %v748 = vsel %vm747, 1, 0
  %v749 = vadd.s32 %v739, %v743
  %v750 = vadd.s32 %v742, %v748
  %vm751 = vc.u32 %v749, %v745
  %v752 = vsel %vm751, 1, 0
  %v753 = vadd.s32 %v749, %v745
  %v754 = vadd.s32 %v750, %v752
  %v755 = vadd.s32 %v754, %v744
  %v756 = vadd.s32 %v755, %v746
  %v757 = vmul.u32 %v712, %v703
  %v758 = vadd.s32 %v734, %v753
  %vm759 = vc.u32 %v734, %v753
  %v760 = vadd.s32 %v756, 1
  %v761 = vsel %vm759, %v760, %v756
  %v762 = vadd.s32 %v757, %v761
  %v763 = vadd.s32 %v762, 536870912
  %v764 = vshrl.u32 %v763, 30
  %v765 = vshll.u32 %v764, 30
  %v766 = vsub.s32 %v762, %v765
  %vm767 = vcmp.lt.s32.totalorder %v766, 0
  %v768 = vsub.s32 0, %v766
  %v769 = vsel %vm767, %v768, %v766
  %v770 = vclz %v769
  %v771 = vsub.s32 %v770, 2
  %vm772 = vcmp.gt.s32.totalorder 0, %v771
  %v773 = vsel %vm772, 0, %v771
  %v774 = vsub.s32 32, %v773
  %v775 = vshll.u32 %v766, %v773
  %v776 = vshrl.u32 %v758, %v774
  %v777 = vor.u32 %v775, %v776
  %v778 = vsub.s32 4294967266, %v773
  %v779 = vadd.s32 %v778, 127
  %v780 = vshll.u32 %v779, 23
  %v781 = vor.u32 4788187, %v780
  %v782 = vand.u32 2147483647, %v781
  %v784 = vcvt.s32.f32 %v777
  %v785 = vmul.f32 %v784, %v782
  %v786 = vxor.u32 %v785, 2147483648
  %v787 = vsel %vm666, %v786, %v785
  %v788 = vsub.s32 4, %v764
  %v789 = vsel %vm666, %v788, %v764
  %v790 = vsel %vm665, %v348, %v787
  %v791 = vsel %vm665, 0, %v789
  %v792 = vmul.f32 %v790, %v790
  %v793 = vmul.f32 %v792, -0.001358992
  %v794 = vadd.f32 %v793, 0.041655596
  %v795 = vmul.f32 %v792, %v794
  %v796 = vadd.f32 %v795, -0.4999988
  %v797 = vmul.f32 %v792, %v796
  %v798 = vadd.f32 1.0, %v797
  %v799 = vmul.f32 %v790, %v790
  %v800 = vmul.f32 %v799, -0.00019511016
  %v801 = vadd.f32 %v800, 0.008332121
  %v802 = vmul.f32 %v799, %v801
  %v803 = vadd.f32 %v802, -0.16666654
  %v804 = vmul.f32 %v799, %v803
  %v805 = vadd.f32 %v804, 1.0
  %v806 = vmul.f32 %v805, %v790
  %vm807 = vweird.f32 %v348
  %v808 = vadd.s32 %v791, 3
  %v809 = vand.u32 %v808, 3
  %vm810 = vcmp.lt.s32.totalorder %v809, 2
  %vm811 = vcmp.eq.s32.totalorder %v809, 0
  %v812 = vxor.u32 %v806, 2147483648
  %v813 = vsel %vm811, %v798, %v812
  %vm814 = vcmp.eq.s32.totalorder %v809, 2
  %v815 = vxor.u32 %v798, 2147483648
  %v816 = vsel %vm814, %v815, %v806
  %v817 = vsel %vm810, %v813, %v816
  %v818 = vsel %vm807, nan, %v817
  %v819 = vand.u32 2147483647, %v507
  %vm820 = vcmp.le.f32.partialorder %v819, 0.7853982
  %vm821 = vcmp.lt.s32.totalorder %v507, 0
  %v822 = vand.u32 %v507, 2139095040
  %v823 = vshrl.u32 %v822, 23
  %v824 = vsub.s32 %v823, 127
  %v825 = vand.u32 2147483647, %v507
  %v826 = vand.u32 %v825, 8388607
  %v827 = vor.u32 %v826, 8388608
  %v828 = vsub.s32 0, %v827
  %v829 = vadd.s32 %v824, 1
  %vm830 = vcmp.gt.s32.totalorder %v829, 0
  %v831 = vsel %vm830, %v829, 0
  %v832 = vshrl.u32 %v831, 5
  %v833 = vand.u32 %v831, 31
  %v834 = vsub.s32 32, %v833
  %v835 = vshrl.u32 683565275, %v834
  %v836 = vshll.u32 683565275, %v833
  %v837 = vshrl.u32 2475754826, %v834
  %v838 = vor.u32 %v836, %v837
  %v839 = vshll.u32 2475754826, %v833
  %v840 = vshrl.u32 2131351028, %v834
  %v841 = vor.u32 %v839, %v840
  %v842 = vshll.u32 2131351028, %v833
  %v843 = vshrl.u32 2102212464, %v834
  %v844 = vor.u32 %v842, %v843
  %v845 = vshll.u32 2102212464, %v833
  %v846 = vshrl.u32 920167782, %v834
  %v847 = vor.u32 %v845, %v846
  %v848 = vshll.u32 920167782, %v833
  %v849 = vshrl.u32 1326507024, %v834
  %v850 = vor.u32 %v848, %v849
  %vm851 = vcmp.lt.s32.totalorder %v832, 1
  %vm852 = vcmp.lt.s32.totalorder %v832, 2
  %vm853 = vcmp.lt.s32.totalorder %v832, 3
  %vm854 = vcmp.lt.s32.totalorder %v832, 4
  %v855 = vsel %vm851, %v835, %v838
  %v856 = vsel %vm854, %v844, 2102212464
  %v857 = vsel %vm853, %v841, %v856
  %v858 = vsel %vm852, %v855, %v857
  %v859 = vsel %vm851, %v838, %v841
  %v860 = vsel %vm854, %v847, 920167782
  %v861 = vsel %vm853, %v844, %v860
  %v862 = vsel %vm852, %v859, %v861
  %v863 = vsel %vm851, %v841, %v844
  %v864 = vsel %vm854, %v850, 1326507024
  %v865 = vsel %vm853, %v847, %v864
  %v866 = vsel %vm852, %v863, %v865
  %v867 = vshll.u32 %v827, 8
  %v868 = vand.u32 %v867, 65535
  %v869 = vshrl.u32 %v867, 16
  %v870 = vand.u32 %v866, 65535
  %v871 = vshrl.u32 %v866, 16
  %v872 = vmul.u32 %v868, %v870
  %v873 = vmul.u32 %v868, %v871
  %v874 = vmul.u32 %v869, %v870
  %v875 = vmul.u32 %v869, %v871
  %v876 = vshll.u32 %v873, 16
  %v877 = vshrl.u32 %v873, 16
  %v878 = vshll.u32 %v874, 16
  %v879 = vshrl.u32 %v874, 16
  %vm880 = vc.u32 %v872, %v876
  %v881 = vsel %vm880, 1, 0
  %v882 = vadd.s32 %v872, %v876
  %v883 = vadd.s32 %v875, %v881
  %vm884 = vc.u32 %v882, %v878
  %v885 = vsel %vm884, 1, 0
  %v886 = vadd.s32 %v882, %v878
  %v887 = vadd.s32 %v883, %v885
  %v888 = vadd.s32 %v887, %v877
  %v889 = vadd.s32 %v888, %v879
  %v890 = vand.u32 %v867, 65535
  %v891 = vshrl.u32 %v867, 16
  %v892 = vand.u32 %v862, 65535
  %v893 = vshrl.u32 %v862, 16
  %v894 = vmul.u32 %v890, %v892
  %v895 = vmul.u32 %v890, %v893
  %v896 = vmul.u32 %v891, %v892
  %v897 = vmul.u32 %v891, %v893
  %v898 = vshll.u32 %v895, 16
  %v899 = vshrl.u32 %v895, 16
  %v900 = vshll.u32 %v896, 16
  %v901 = vshrl.u32 %v896, 16
  %vm902 = vc.u32 %v894, %v898
  %v903 = vsel %vm902, 1, 0
  %v904 = vadd.s32 %v894, %v898
  %v905 = vadd.s32 %v897, %v903
  %vm906 = vc.u32 %v904, %v900
  %v907 = vsel %vm906, 1, 0
  %v908 = vadd.s32 %v904, %v900
  %v909 = vadd.s32 %v905, %v907
  %v910 = vadd.s32 %v909, %v899
  %v911 = vadd.s32 %v910, %v901
  %v912 = vmul.u32 %v867, %v858
  %v913 = vadd.s32 %v889, %v908
  %vm914 = vc.u32 %v889, %v908
  %v915 = vadd.s32 %v911, 1
  %v916 = vsel %vm914, %v915, %v911
  %v917 = vadd.s32 %v912, %v916
  %v918 = vadd.s32 %v917, 536870912
  %v919 = vshrl.u32 %v918, 30
  %v920 = vshll.u32 %v919, 30
  %v921 = vsub.s32 %v917, %v920
  %vm922 = vcmp.lt.s32.totalorder %v921, 0
  %v923 = vsub.s32 0, %v921
  %v924 = vsel %vm922, %v923, %v921
  %v925 = vclz %v924
  %v926 = vsub.s32 %v925, 2
  %vm927 = vcmp.gt.s32.totalorder 0, %v926
  %v928 = vsel %vm927, 0, %v926
  %v929 = vsub.s32 32, %v928
  %v930 = vshll.u32 %v921, %v928
  %v931 = vshrl.u32 %v913, %v929
  %v932 = vor.u32 %v930, %v931
  %v933 = vsub.s32 4294967266, %v928
  %v934 = vadd.s32 %v933, 127
  %v935 = vshll.u32 %v934, 23
  %v936 = vor.u32 4788187, %v935
  %v937 = vand.u32 2147483647, %v936
  %v939 = vcvt.s32.f32 %v932
  %v940 = vmul.f32 %v939, %v937
  %v941 = vxor.u32 %v940, 2147483648
  %v942 = vsel %vm821, %v941, %v940
  %v943 = vsub.s32 4, %v919
  %v944 = vsel %vm821, %v943, %v919
  %v945 = vsel %vm820, %v507, %v942
  %v946 = vsel %vm820, 0, %v944
  %v947 = vmul.f32 %v945, %v945
  %v948 = vmul.f32 %v947, -0.001358992
  %v949 = vadd.f32 %v948, 0.041655596
  %v950 = vmul.f32 %v947, %v949
  %v951 = vadd.f32 %v950, -0.4999988
  %v952 = vmul.f32 %v947, %v951
  %v953 = vadd.f32 1.0, %v952
  %v954 = vmul.f32 %v945, %v945
  %v955 = vmul.f32 %v954, -0.00019511016
  %v956 = vadd.f32 %v955, 0.008332121
  %v957 = vmul.f32 %v954, %v956
  %v958 = vadd.f32 %v957, -0.16666654
  %v959 = vmul.f32 %v954, %v958
  %v960 = vadd.f32 %v959, 1.0
  %v961 = vmul.f32 %v960, %v945
  %vm962 = vweird.f32 %v507
  %v963 = vadd.s32 %v946, 3
  %v964 = vand.u32 %v963, 3
  %vm965 = vcmp.lt.s32.totalorder %v964, 2
  %vm966 = vcmp.eq.s32.totalorder %v964, 0
  %v967 = vxor.u32 %v961, 2147483648
  %v968 = vsel %vm966, %v953, %v967
  %vm969 = vcmp.eq.s32.totalorder %v964, 2
  %v970 = vxor.u32 %v953, 2147483648
  %v971 = vsel %vm969, %v970, %v961
  %v972 = vsel %vm965, %v968, %v971
  %v973 = vsel %vm962, nan, %v972
  %974 = vst [vmem:[%s2] sm:$0xff] %v663
  %975 = vst [vmem:[%s2 + $0x8] sm:$0xff] %v818
  %976 = vst [vmem:[%s2 + $0x10] sm:$0xff] %v973
  // Predicated region
  $region10: #{theory_forward.1} parent=0 // pred_check
    _
  $region11: #{theory_forward.1} parent=0 // pred_check_branch
    %978 = sbr.rel (0) target = $region13
  $region12: #{theory_forward.1} parent=0 // pred_region
    _
  $region13: #{theory_forward.1} parent=0 // pred_fallthru
    _
  // Predicated region
  $region14: #{theory_forward.1} parent=0 // pred_check
    _
  $region15: #{theory_forward.1} parent=0 // pred_check_branch
    %980 = sbr.rel (0) target = $region17
  $region16: #{theory_forward.1} parent=0 // pred_region
    _
  $region17: #{theory_forward.1} parent=0 // pred_fallthru
    _

</llo_original>
